<compile_context>
chip_gen: v7x
topology: tpu7x:2x2x1
jax: 0.10.0
libtpu: 0.0.40
codegen_flags: <defaults>
</compile_context>

<pallas_src>
import jax
import jax.numpy as jnp
from jax.experimental import pallas as pl
from jax.experimental.pallas import tpu as pltpu

SUBLANE = 8


def _round_up(x, m):
    return ((x + m - 1) // m) * m


def mlp_kernel(x_ref, w1_ref, b1_ref, w2_ref, b2_ref, o_ref):
    # First Linear: (tb, K) @ (K, H), f32 accumulation on the MXU.
    h = jnp.dot(x_ref[...], w1_ref[...], preferred_element_type=jnp.float32)
    # Bias + ReLU on the VPU (kept in f32 — cheapest elementwise mix on v5e too).
    h = jnp.maximum(h + b1_ref[...], 0.0)
    # Second Linear: (tb, H) @ (H, N). N is the true (unpadded) out_features.
    out = jnp.dot(h, w2_ref[...], preferred_element_type=jnp.float32)
    o_ref[...] = (out + b2_ref[...]).astype(o_ref.dtype)


def my_sequential_forward(x, w1, b1, w2, b2, *, tb=None):
    """Fused Linear(20,256) -> ReLU -> Linear(256,10) forward pass.

    Weights are stored (in_features, out_features), i.e. the kernel computes
    x @ W + b (equivalent to PyTorch's x @ W.T + b with its layout).
    """
    B, K = x.shape
    Kw, H = w1.shape
    Hw, N = w2.shape
    assert K == Kw and H == Hw, "shape mismatch"

    b1 = b1.reshape(1, H)
    b2 = b2.reshape(1, N)

    # ---- Batch tiling ------------------------------------------------------
    # K and N are intentionally left unpadded: a block dim equal to the full
    # array dim is legal even if it is not a multiple of (8, 128); Mosaic pads
    # the short lane dims internally at zero HBM cost.
    if B <= SUBLANE:
        # Tiny batch (tutorial case B=2): one full-array block, no padding or
        # slicing ops around the kernel at all.
        tb = B
        Bp = B
        xp = x
    else:
        if tb is None:
            # Target large (~512-row) tiles for HBM-roofline efficiency, but
            # keep at least 2 grid steps so both v7x TensorCores get work.
            tb = min(512, _round_up(pl.cdiv(B, 2), SUBLANE))
        Bp = _round_up(B, tb)
        # Padded batch rows produce garbage (relu(b1) @ w2 + b2); they are
        # sliced away below and never reduced over.
        xp = x if Bp == B else jnp.zeros((Bp, K), x.dtype).at[:B].set(x)

    grid = (Bp // tb,)

    itemsize = jnp.dtype(x.dtype).itemsize
    flops = 2 * Bp * (K * H + H * N)
    bytes_accessed = itemsize * (Bp * K + K * H + H + H * N + N + Bp * N)

    out = pl.pallas_call(
        mlp_kernel,
        out_shape=jax.ShapeDtypeStruct((Bp, N), x.dtype),
        grid_spec=pltpu.PrefetchScalarGridSpec(
            num_scalar_prefetch=0,
            grid=grid,
            in_specs=[
                # Activations: tiled over batch, double-buffered by Pallas.
                pl.BlockSpec((tb, K), lambda i: (i, 0)),
                # Weights/biases: full-array blocks with constant index_map,
                # so they stay resident in VMEM across all grid steps.
                pl.BlockSpec((K, H), lambda i: (0, 0)),
                pl.BlockSpec((1, H), lambda i: (0, 0)),
                pl.BlockSpec((H, N), lambda i: (0, 0)),
                pl.BlockSpec((1, N), lambda i: (0, 0)),
            ],
            out_specs=pl.BlockSpec((tb, N), lambda i: (i, 0)),
        ),
        compiler_params=pltpu.CompilerParams(
            dimension_semantics=("parallel",),  # shards batch across TCs on v7x
        ),
        cost_estimate=pl.CostEstimate(
            flops=flops, transcendentals=0, bytes_accessed=bytes_accessed
        ),
    )(xp, w1, b1, w2, b2)

    return out if Bp == B else out[:B]


def init_params(key, in_dim=20, hidden=256, out_dim=10, dtype=jnp.float32):
    """Deterministic parameter init mimicking nn.Linear's uniform init."""
    k1, k2, k3, k4 = jax.random.split(key, 4)
    lim1 = 1.0 / (in_dim ** 0.5)
    lim2 = 1.0 / (hidden ** 0.5)
    # Stored as (in, out) so the kernel computes x @ W directly.
    w1 = jax.random.uniform(k1, (in_dim, hidden), dtype, -lim1, lim1)
    b1 = jax.random.uniform(k2, (1, hidden), dtype, -lim1, lim1)
    w2 = jax.random.uniform(k3, (hidden, out_dim), dtype, -lim2, lim2)
    b2 = jax.random.uniform(k4, (1, out_dim), dtype, -lim2, lim2)
    return w1, b1, w2, b2


if __name__ == "__main__":
    key = jax.random.PRNGKey(0)
    kx, kp = jax.random.split(key)

    # Small shapes consistent with the tutorial: batch=2, in=20, hidden=256, out=10.
    x = jax.random.uniform(kx, (2, 20), jnp.float32)
    w1, b1, w2, b2 = init_params(kp)

    # jit the wrapper so any wrapper-side ops (none on the B=2 path) fuse/hoist.
    fwd = jax.jit(my_sequential_forward)
    out = fwd(x, w1, b1, w2, b2)
    jax.block_until_ready(out)

    # Reference check in plain JAX (same math as the PyTorch forward).
    ref = jnp.maximum(x @ w1 + b1, 0.0) @ w2 + b2
    assert out.shape == (2, 10)
    assert jnp.allclose(out, ref, atol=1e-5, rtol=1e-5)

    print("KERNEL_OK")
</pallas_src>

<mosaic_0001>
module attributes {stable_mosaic.version = 11 : i64} {
  func.func @mlp_kernel(%arg0: i32, %arg1: memref<2x20xf32, #tpu.memory_space<vmem>>, %arg2: memref<20x256xf32, #tpu.memory_space<vmem>>, %arg3: memref<1x256xf32, #tpu.memory_space<vmem>>, %arg4: memref<256x10xf32, #tpu.memory_space<vmem>>, %arg5: memref<1x10xf32, #tpu.memory_space<vmem>>, %arg6: memref<2x10xf32, #tpu.memory_space<vmem>>) attributes {dimension_semantics = [#tpu.dimension_semantics<parallel>], iteration_bounds = array<i64: 1>, scalar_prefetch = 0 : i64, scratch_operands = 0 : i64, tpu.core_type = #tpu.core_type<tc>, window_params = [{transform_indices = @transform_0, window_bounds = array<i64: 2, 20>}, {pipeline_mode = #tpu.pipeline_mode<synchronous>, transform_indices = @transform_1, window_bounds = array<i64: 20, 256>}, {pipeline_mode = #tpu.pipeline_mode<synchronous>, transform_indices = @transform_2, window_bounds = array<i64: 1, 256>}, {pipeline_mode = #tpu.pipeline_mode<synchronous>, transform_indices = @transform_3, window_bounds = array<i64: 256, 10>}, {pipeline_mode = #tpu.pipeline_mode<synchronous>, transform_indices = @transform_4, window_bounds = array<i64: 1, 10>}, {transform_indices = @transform_5, window_bounds = array<i64: 2, 10>}]} {
    %c0 = arith.constant 0 : index
    %c0_0 = arith.constant 0 : index
    %0 = vector.load %arg1[%c0, %c0_0] : memref<2x20xf32, #tpu.memory_space<vmem>>, vector<2x20xf32>
    %c0_1 = arith.constant 0 : index
    %c0_2 = arith.constant 0 : index
    %1 = vector.load %arg2[%c0_1, %c0_2] : memref<20x256xf32, #tpu.memory_space<vmem>>, vector<20x256xf32>
    %cst = arith.constant dense<0.000000e+00> : vector<2x256xf32>
    %2 = tpu.matmul %0, %1, %cst {dimension_numbers = #tpu.dot_dimension_numbers<[1], [0], [0], [1], [0, 0, 1, 1], [], []>} : vector<2x20xf32>, vector<20x256xf32>, vector<2x256xf32> -> vector<2x256xf32>
    %c0_3 = arith.constant 0 : index
    %c0_4 = arith.constant 0 : index
    %3 = vector.load %arg3[%c0_3, %c0_4] : memref<1x256xf32, #tpu.memory_space<vmem>>, vector<1x256xf32>
    %4 = vector.broadcast %3 : vector<1x256xf32> to vector<2x256xf32>
    %5 = arith.addf %2, %4 : vector<2x256xf32>
    %cst_5 = arith.constant 0.000000e+00 : f32
    %6 = vector.broadcast %cst_5 : f32 to vector<2x256xf32>
    %7 = arith.maximumf %5, %6 : vector<2x256xf32>
    %c0_6 = arith.constant 0 : index
    %c0_7 = arith.constant 0 : index
    %8 = vector.load %arg4[%c0_6, %c0_7] : memref<256x10xf32, #tpu.memory_space<vmem>>, vector<256x10xf32>
    %cst_8 = arith.constant dense<0.000000e+00> : vector<2x10xf32>
    %9 = tpu.matmul %7, %8, %cst_8 {dimension_numbers = #tpu.dot_dimension_numbers<[1], [0], [0], [1], [0, 0, 1, 1], [], []>} : vector<2x256xf32>, vector<256x10xf32>, vector<2x10xf32> -> vector<2x10xf32>
    %c0_9 = arith.constant 0 : index
    %c0_10 = arith.constant 0 : index
    %10 = vector.load %arg5[%c0_9, %c0_10] : memref<1x10xf32, #tpu.memory_space<vmem>>, vector<1x10xf32>
    %11 = vector.broadcast %10 : vector<1x10xf32> to vector<2x10xf32>
    %12 = arith.addf %9, %11 : vector<2x10xf32>
    %c0_11 = arith.constant 0 : index
    %c0_12 = arith.constant 0 : index
    %13 = vector.load %arg6[%c0_11, %c0_12] : memref<2x10xf32, #tpu.memory_space<vmem>>, vector<2x10xf32>
    tpu.vector_store %arg6[%c0_11, %c0_12], %12 {strides = array<i32>} : memref<2x10xf32, #tpu.memory_space<vmem>>, vector<2x10xf32>,
    return
  }
  func.func @transform_0(%arg0: i32) -> (i32, i32) {
    %c0_i32 = arith.constant 0 : i32
    %c0_i32_0 = arith.constant 0 : i32
    return %arg0, %c0_i32 : i32, i32
  }
  func.func @transform_1(%arg0: i32) -> (i32, i32) {
    %c0_i32 = arith.constant 0 : i32
    %c0_i32_0 = arith.constant 0 : i32
    %c0_i32_1 = arith.constant 0 : i32
    return %c0_i32, %c0_i32_0 : i32, i32
  }
  func.func @transform_2(%arg0: i32) -> (i32, i32) {
    %c0_i32 = arith.constant 0 : i32
    %c0_i32_0 = arith.constant 0 : i32
    %c0_i32_1 = arith.constant 0 : i32
    return %c0_i32, %c0_i32_0 : i32, i32
  }
  func.func @transform_3(%arg0: i32) -> (i32, i32) {
    %c0_i32 = arith.constant 0 : i32
    %c0_i32_0 = arith.constant 0 : i32
    %c0_i32_1 = arith.constant 0 : i32
    return %c0_i32, %c0_i32_0 : i32, i32
  }
  func.func @transform_4(%arg0: i32) -> (i32, i32) {
    %c0_i32 = arith.constant 0 : i32
    %c0_i32_0 = arith.constant 0 : i32
    %c0_i32_1 = arith.constant 0 : i32
    return %c0_i32, %c0_i32_0 : i32, i32
  }
  func.func @transform_5(%arg0: i32) -> (i32, i32) {
    %c0_i32 = arith.constant 0 : i32
    %c0_i32_0 = arith.constant 0 : i32
    return %arg0, %c0_i32 : i32, i32
  }
}

</mosaic_0001>

<llo_original>
// kernel: my_sequential_forward.1
$region0: #{my_sequential_forward.1}
  #allocation0 [shape = 'u32[]', space=smem, size = 0x4, offset = 0x4, fixed_abs, tag = 'smem constant byte address 0x4 - core index']
  #allocation1 [shape = 'u32[144,128]{1,0:T(1,128)}', space=vmem, size = 0x12000, scoped, tag = 'internal scratch']
  %s0 = inlined_call_operand.vmem [shape: f32[2,20], index: 0, kind: input, shape index: {}]
  %s1 = inlined_call_operand.vmem [shape: f32[20,256], index: 1, kind: input, shape index: {}]
  %s2 = inlined_call_operand.vmem [shape: f32[1,256], index: 2, kind: input, shape index: {}]
  %s3 = inlined_call_operand.vmem [shape: f32[256,10], index: 3, kind: input, shape index: {}]
  %s4 = inlined_call_operand.vmem [shape: f32[1,10], index: 4, kind: input, shape index: {}]
  %s5 = inlined_call_operand.hbm [shape: f32[2,10], index: 5, kind: output, shape index: {}]
  %s6 = sld [smem:[#allocation0]]
  $region30: #{my_sequential_forward.1} parent=0
    _
  %s8 = ssub.s32 1, %s6
  %s9 = scalar_select 0, %s8, %s6
  $region1: #{my_sequential_forward.1} parent=0
    #allocation2 [shape = 'u8[1024]{0}', space=vmem, size = 0x400, scoped, tag = 'output window, operand 0, single buffered']
    #allocation3 [shape = 's32[1]{0}', space=sflag, size = 0x4, scoped, tag = 'scoped memory for my_sequential_forward.1']
    %10 = vsyncpa [#allocation3], 0
    // Predicated region
    $region2: #{my_sequential_forward.1} parent=1 // pred_check
      _
    $region3: #{my_sequential_forward.1} parent=1 // pred_check_branch
      %12 = sbr.rel (0) target = $region5
    $region4: #{my_sequential_forward.1} parent=1 // pred_region
      _
    $region5: #{my_sequential_forward.1} parent=1 // pred_fallthru
      _
    // Predicated region
    $region6: #{my_sequential_forward.1} parent=1 // pred_check
      _
    $region7: #{my_sequential_forward.1} parent=1 // pred_check_branch
      %14 = sbr.rel (0) target = $region9
    $region8: #{my_sequential_forward.1} parent=1 // pred_region
      _
    $region9: #{my_sequential_forward.1} parent=1 // pred_fallthru
      _
    // Predicated region
    $region10: #{my_sequential_forward.1} parent=1 // pred_check
      _
    $region11: #{my_sequential_forward.1} parent=1 // pred_check_branch
      %16 = sbr.rel (0) target = $region13
    $region12: #{my_sequential_forward.1} parent=1 // pred_region
      _
    $region13: #{my_sequential_forward.1} parent=1 // pred_fallthru
      _
    // Predicated region
    $region14: #{my_sequential_forward.1} parent=1 // pred_check
      _
    $region15: #{my_sequential_forward.1} parent=1 // pred_check_branch
      %18 = sbr.rel (0) target = $region17
    $region16: #{my_sequential_forward.1} parent=1 // pred_region
      _
    $region17: #{my_sequential_forward.1} parent=1 // pred_fallthru
      _
    // Predicated region
    $region18: #{my_sequential_forward.1} parent=1 // pred_check
      _
    $region19: #{my_sequential_forward.1} parent=1 // pred_check_branch
      %20 = sbr.rel (0) target = $region21
    $region20: #{my_sequential_forward.1} parent=1 // pred_region
      _
    $region21: #{my_sequential_forward.1} parent=1 // pred_fallthru
      _
    %v21 = vld [vmem:[%s0] sm:$0x3]
    %v22 = vld [vmem:[%s1] sm:$0xff]
    %v23 = vld [vmem:[%s1 + $0x8] sm:$0xff]
    %v24 = vld [vmem:[%s1 + $0x10] sm:$0xff]
    %v25 = vld [vmem:[%s1 + $0x18] sm:$0xff]
    %v26 = vld [vmem:[%s1 + $0x20] sm:$0xf]
    %v27 = vld [vmem:[%s1 + $0x28] sm:$0xf]
    %v28 = vld [vmem:[%s2] sm:$0x3]
    %v30 = vlaneseq
    %v31 = vshrl.u32 %v30, 7
    %v32 = vsub.s32 0, %v31
    %v33 = vrot.slane %v28, %v32
    %v34 = vlaneseq
    %v35 = vshrl.u32 %v34, 7
    %v36 = vsub.s32 1, %v35
    %v37 = vrot.slane %v28, %v36
    %vm40 = vcmask 162816
    %v42 = vsel %vm40, %v21, 0
    %vm44 = vcmask 1043456
    %v46 = vsel %vm44, %v26, 0
    %v49 = vsel %vm44, %v27, 0
    %51 = vmatprep.subr.mxu0 %v23
    %52 = vmatpush1.msra.mxu0 %v22
    %53 = vmatprep.subr.mxu0 %v25
    %54 = vmatpush1.msra.mxu0 %v24
    %55 = vmatprep.subr.mxu0 %v49
    %56 = vmatpush1.msra.mxu0 %v46
    %57 = vmatprep.subr.mxu0 0.0
    %58 = vmatpush1.msra.mxu0 0.0
    %59 = vmatprep.subr.mxu0 0.0
    %60 = vmatpush1.msra.mxu0 0.0
    %61 = vmatprep.subr.mxu0 0.0
    %62 = vmatpush1.msra.mxu0 0.0
    %63 = vmatprep.subr.mxu0 0.0
    %64 = vmatpush1.msra.mxu0 0.0
    %65 = vmatprep.subr.mxu0 0.0
    %66 = vmatpush1.msra.mxu0 0.0
    %67 = vmatprep.subr.mxu0 0.0
    %68 = vmatpush1.msra.mxu0 0.0
    %69 = vmatprep.subr.mxu0 0.0
    %70 = vmatpush1.msra.mxu0 0.0
    %71 = vmatprep.subr.mxu0 0.0
    %72 = vmatpush1.msra.mxu0 0.0
    %73 = vmatprep.subr.mxu0 0.0
    %74 = vmatpush1.msra.mxu0 0.0
    %75 = vmatprep.subr.mxu0 0.0
    %76 = vmatpush1.msra.mxu0 0.0
    %77 = vmatprep.subr.mxu0 0.0
    %78 = vmatpush1.msra.mxu0 0.0
    %79 = vmatprep.subr.mxu0 0.0
    %80 = vmatpush1.msra.mxu0 0.0
    %81 = vmatprep.subr.mxu0 0.0
    %82 = vmatpush1.msra.mxu0 0.0
    %83 = vmatprep.subr.mxu0 0.0
    %84 = vmatpush1.msra.mxu0 0.0
    %85 = vmatprep.subr.mxu0 0.0
    %86 = vmatpush1.msra.mxu0 0.0
    %87 = vmatprep.subr.mxu0 0.0
    %88 = vmatpush1.msra.mxu0 0.0
    %89 = vmatprep.subr.mxu0 0.0
    %90 = vmatpush1.msra.mxu0 0.0
    %91 = vmatprep.subr.mxu0 0.0
    %92 = vmatpush1.msra.mxu0 0.0
    %93 = vmatprep.subr.mxu0 0.0
    %94 = vmatpush1.msra.mxu0 0.0
    %95 = vmatprep.subr.mxu0 0.0
    %96 = vmatpush1.msra.mxu0 0.0
    %97 = vmatprep.subr.mxu0 0.0
    %98 = vmatpush1.msra.mxu0 0.0
    %99 = vmatprep.subr.mxu0 0.0
    %100 = vmatpush1.msra.mxu0 0.0
    %101 = vmatprep.subr.mxu0 0.0
    %102 = vmatpush1.msra.mxu0 0.0
    %103 = vmatprep.subr.mxu0 0.0
    %104 = vmatpush1.msra.mxu0 0.0
    %105 = vmatprep.subr.mxu0 0.0
    %106 = vmatpush1.msra.mxu0 0.0
    %107 = vmatprep.subr.mxu0 0.0
    %108 = vmatpush1.msra.mxu0 0.0
    %109 = vmatprep.subr.mxu0 0.0
    %110 = vmatpush1.msra.mxu0 0.0
    %111 = vmatprep.subr.mxu0 0.0
    %112 = vmatpush1.msra.mxu0 0.0
    %113 = vmatprep.subr.mxu0 0.0
    %114 = vmatpush1.msra.mxu0 0.0
    %115 = vmatprep.mubr.f32.mxu0 0.0
    %116 = vmatmul.mubr.f32.gmra.mrb[0].mxu0 %v42
    %v117 = vpop.f32.mrb[0].mxu0
    %v118 = vadd.f32 %v33, %v117
    %v119 = vpop.f32.mrb[0].mxu0
    %v120 = vadd.f32 %v37, %v119
    %121 = vdwg.mxu0
    %v122 = vmax.f32 %v118, 0.0
    %v123 = vmax.f32 %v120, 0.0
    %v124 = vld [vmem:[%s3] sm:$0xff]
    %v125 = vld [vmem:[%s3 + $0x8] sm:$0xff]
    %v126 = vld [vmem:[%s3 + $0x10] sm:$0xff]
    %v127 = vld [vmem:[%s3 + $0x18] sm:$0xff]
    %v128 = vld [vmem:[%s3 + $0x20] sm:$0xff]
    %v129 = vld [vmem:[%s3 + $0x28] sm:$0xff]
    %v130 = vld [vmem:[%s3 + $0x30] sm:$0xff]
    %v131 = vld [vmem:[%s3 + $0x38] sm:$0xff]
    %v132 = vld [vmem:[%s3 + $0x40] sm:$0xff]
    %v133 = vld [vmem:[%s3 + $0x48] sm:$0xff]
    %v134 = vld [vmem:[%s3 + $0x50] sm:$0xff]
    %v135 = vld [vmem:[%s3 + $0x58] sm:$0xff]
    %v136 = vld [vmem:[%s3 + $0x60] sm:$0xff]
    %v137 = vld [vmem:[%s3 + $0x68] sm:$0xff]
    %v138 = vld [vmem:[%s3 + $0x70] sm:$0xff]
    %v139 = vld [vmem:[%s3 + $0x78] sm:$0xff]
    %v140 = vld [vmem:[%s3 + $0x80] sm:$0xff]
    %v141 = vld [vmem:[%s3 + $0x88] sm:$0xff]
    %v142 = vld [vmem:[%s3 + $0x90] sm:$0xff]
    %v143 = vld [vmem:[%s3 + $0x98] sm:$0xff]
    %v144 = vld [vmem:[%s3 + $0xa0] sm:$0xff]
    %v145 = vld [vmem:[%s3 + $0xa8] sm:$0xff]
    %v146 = vld [vmem:[%s3 + $0xb0] sm:$0xff]
    %v147 = vld [vmem:[%s3 + $0xb8] sm:$0xff]
    %v148 = vld [vmem:[%s3 + $0xc0] sm:$0xff]
    %v149 = vld [vmem:[%s3 + $0xc8] sm:$0xff]
    %v150 = vld [vmem:[%s3 + $0xd0] sm:$0xff]
    %v151 = vld [vmem:[%s3 + $0xd8] sm:$0xff]
    %v152 = vld [vmem:[%s3 + $0xe0] sm:$0xff]
    %v153 = vld [vmem:[%s3 + $0xe8] sm:$0xff]
    %v154 = vld [vmem:[%s3 + $0xf0] sm:$0xff]
    %v155 = vld [vmem:[%s3 + $0xf8] sm:$0xff]
    %v156 = vld [vmem:[%s4] sm:$0x1]
    %v158 = vlaneseq
    %v159 = vshrl.u32 %v158, 7
    %v160 = vsub.s32 0, %v159
    %v161 = vrot.slane %v156, %v160
    %163 = vmatprep.subr.mxu0 0.0
    %164 = vmatpush1.msra.mxu0 %v124
    %165 = vmatprep.subr.mxu0 0.0
    %166 = vmatpush1.msra.mxu0 %v125
    %167 = vmatprep.subr.mxu0 0.0
    %168 = vmatpush1.msra.mxu0 %v126
    %169 = vmatprep.subr.mxu0 0.0
    %170 = vmatpush1.msra.mxu0 %v127
    %171 = vmatprep.subr.mxu0 0.0
    %172 = vmatpush1.msra.mxu0 %v128
    %173 = vmatprep.subr.mxu0 0.0
    %174 = vmatpush1.msra.mxu0 %v129
    %175 = vmatprep.subr.mxu0 0.0
    %176 = vmatpush1.msra.mxu0 %v130
    %177 = vmatprep.subr.mxu0 0.0
    %178 = vmatpush1.msra.mxu0 %v131
    %179 = vmatprep.subr.mxu0 0.0
    %180 = vmatpush1.msra.mxu0 %v132
    %181 = vmatprep.subr.mxu0 0.0
    %182 = vmatpush1.msra.mxu0 %v133
    %183 = vmatprep.subr.mxu0 0.0
    %184 = vmatpush1.msra.mxu0 %v134
    %185 = vmatprep.subr.mxu0 0.0
    %186 = vmatpush1.msra.mxu0 %v135
    %187 = vmatprep.subr.mxu0 0.0
    %188 = vmatpush1.msra.mxu0 %v136
    %189 = vmatprep.subr.mxu0 0.0
    %190 = vmatpush1.msra.mxu0 %v137
    %191 = vmatprep.subr.mxu0 0.0
    %192 = vmatpush1.msra.mxu0 %v138
    %193 = vmatprep.subr.mxu0 0.0
    %194 = vmatpush1.msra.mxu0 %v139
    %195 = vmatprep.subr.mxu0 0.0
    %196 = vmatpush1.msra.mxu0 %v140
    %197 = vmatprep.subr.mxu0 0.0
    %198 = vmatpush1.msra.mxu0 %v141
    %199 = vmatprep.subr.mxu0 0.0
    %200 = vmatpush1.msra.mxu0 %v142
    %201 = vmatprep.subr.mxu0 0.0
    %202 = vmatpush1.msra.mxu0 %v143
    %203 = vmatprep.subr.mxu0 0.0
    %204 = vmatpush1.msra.mxu0 %v144
    %205 = vmatprep.subr.mxu0 0.0
    %206 = vmatpush1.msra.mxu0 %v145
    %207 = vmatprep.subr.mxu0 0.0
    %208 = vmatpush1.msra.mxu0 %v146
    %209 = vmatprep.subr.mxu0 0.0
    %210 = vmatpush1.msra.mxu0 %v147
    %211 = vmatprep.subr.mxu0 0.0
    %212 = vmatpush1.msra.mxu0 %v148
    %213 = vmatprep.subr.mxu0 0.0
    %214 = vmatpush1.msra.mxu0 %v149
    %215 = vmatprep.subr.mxu0 0.0
    %216 = vmatpush1.msra.mxu0 %v150
    %217 = vmatprep.subr.mxu0 0.0
    %218 = vmatpush1.msra.mxu0 %v151
    %219 = vmatprep.subr.mxu0 0.0
    %220 = vmatpush1.msra.mxu0 %v152
    %221 = vmatprep.subr.mxu0 0.0
    %222 = vmatpush1.msra.mxu0 %v153
    %223 = vmatprep.subr.mxu0 0.0
    %224 = vmatpush1.msra.mxu0 %v154
    %225 = vmatprep.subr.mxu0 0.0
    %226 = vmatpush1.msra.mxu0 %v155
    %227 = vmatprep.mubr.f32.mxu0 %v123
    %228 = vmatmul.mubr.f32.gmra.mrb[0].mxu0 %v122
    %v229 = vpop.f32.mrb[0].mxu0
    %v230 = vadd.f32 %v161, %v229
    %v231 = vpop.f32.mrb[0].mxu0
    %232 = vdwg.mxu0
    %vm233 = vcmask 74752
    %234 = vst.msk [vmem:[#allocation2] sm:$0x3] %vm233, %v230
    // Predicated region
    $region22: #{my_sequential_forward.1} parent=1 // pred_check
      _
    $region23: #{my_sequential_forward.1} parent=1 // pred_check_branch
      %236 = sbr.rel (0) target = $region25
    $region24: #{my_sequential_forward.1} parent=1 // pred_region
      %s238 = ssub.s32 32, 32
      %239 = vsyncadd [#allocation3], %s238
      %s241 = sshll.u32 [#allocation2], 4
      %s242 = int_to_ptr.vmem [resolvable:$true] %s241
      %244 = dma.vmem_to_hbm [thread:$0]  %s242, 32, %s5, [#allocation3]
    $region25: #{my_sequential_forward.1} parent=1 // pred_fallthru
      _
    // Predicated region
    $region26: #{my_sequential_forward.1} parent=1 // pred_check
      _
    $region27: #{my_sequential_forward.1} parent=1 // pred_check_branch
      %246 = sbr.rel (0) target = $region29
    $region28: #{my_sequential_forward.1} parent=1 // pred_region
      %247 = dma.done [#allocation3], 32
    $region29: #{my_sequential_forward.1} parent=1 // pred_fallthru
      _
    %248 = vsyncpa [#allocation3], 1

</llo_original>
